<compile_context>
chip_gen: v7x
topology: tpu7x:2x2x1
jax: 0.10.0
libtpu: 0.0.40
codegen_flags: <defaults>
</compile_context>

<pallas_src>
import jax
import jax.numpy as jnp
from jax import lax
from jax.experimental import pallas as pl
from jax.experimental.pallas import tpu as pltpu


_VMEM = pl.BlockSpec(memory_space=pltpu.MemorySpace.VMEM)


# ---------------------------------------------------------------------------
# BertEmbedding tail: embeddings = bmm(transforms, concat(hidden_states[-8:]))
# Concat is fused into the kernel: 8 separate inputs, 8 aligned column-slice
# writes (production BERT hidden = 768 is a multiple of 128, so slices stay
# lane-aligned there too).
# ---------------------------------------------------------------------------
def _embed_bmm_kernel(t_ref, *refs):
    hs_refs, o_ref = refs[:-1], refs[-1]
    hb = hs_refs[0].shape[-1]
    t = t_ref[0].astype(jnp.bfloat16)                       # (WL, BL)
    for k, h_ref in enumerate(hs_refs):
        o_ref[0, :, k * hb:(k + 1) * hb] = jnp.dot(
            t, h_ref[0].astype(jnp.bfloat16),
            preferred_element_type=jnp.float32)              # (WL, hb)


def embed_bmm(transforms, hidden_states):
    B, WL, BL = transforms.shape
    Hb = hidden_states[0].shape[-1]
    n = len(hidden_states)
    D = n * Hb
    return pl.pallas_call(
        _embed_bmm_kernel,
        out_shape=jax.ShapeDtypeStruct((B, WL, D), jnp.float32),
        grid=(B,),
        in_specs=[pl.BlockSpec((1, WL, BL), lambda b: (b, 0, 0))]
                 + [pl.BlockSpec((1, BL, Hb), lambda b: (b, 0, 0))] * n,
        out_specs=pl.BlockSpec((1, WL, D), lambda b: (b, 0, 0)),
        compiler_params=pltpu.CompilerParams(
            dimension_semantics=("parallel",)),   # v7x: shard batch over 2 TCs
    )(transforms, *hidden_states)


class BertEmbedding:
    """Concat(last 8 hidden states) + bmm tail of the PyTorch BertEmbedding."""
    # TODO(synk): the pretrained HuggingFace BERT encoder itself (AutoModel
    # weights) has no in-script Pallas equivalent; this consumes the per-layer
    # hidden states it would produce.

    def __init__(self, hidden_size):
        self.hidden_size = hidden_size
        self.output_size = 8 * hidden_size

    def __call__(self, inputs):
        BL = inputs["bert_longest_length"]
        WL = inputs["word_longest_length"]
        hs = [h[:, :BL, :] for h in inputs["bert_hidden_states"][-8:]]
        transforms = inputs["transform_matrix"][:, :WL, :BL]
        return embed_bmm(transforms, hs)


# ---------------------------------------------------------------------------
# SelectItem: pure pytree selection -- no kernel, no HBM copy.
# ---------------------------------------------------------------------------
class SelectItem:
    def __init__(self, item_index):
        self._name = "selectitem"
        self.item_index = item_index

    def __call__(self, inputs):
        return inputs[self.item_index]


# ---------------------------------------------------------------------------
# Fused LSTM layer: one pallas_call does
#   (a) whole-sequence input projection (bf16 MXU, f32 acc) into VMEM scratch,
#   (b) the time recurrence as an in-kernel unrolled loop (h/c live in vregs),
#   (c) final h_n / c_n written once after the loop.
# ---------------------------------------------------------------------------
def _lstm_layer_kernel(x_ref, wih_ref, whh_ref, b_ref,
                       hseq_ref, hn_ref, cn_ref, gates_scr):
    H = whh_ref.shape[0]
    L = x_ref.shape[0]

    # (a) input projection for the whole sequence; gates never touch HBM.
    gates_scr[...] = (
        jnp.dot(x_ref[...].astype(jnp.bfloat16), wih_ref[...],
                preferred_element_type=jnp.float32) + b_ref[...])

    def step(t, h, c):
        g = gates_scr[pl.ds(t, 1), :] + jnp.dot(
            h.astype(jnp.bfloat16), whh_ref[...],
            preferred_element_type=jnp.float32)               # (1, 4H)
        i_g = jax.nn.sigmoid(g[:, 0 * H:1 * H])
        f_g = jax.nn.sigmoid(g[:, 1 * H:2 * H])
        g_g = jnp.tanh(g[:, 2 * H:3 * H])
        o_g = jax.nn.sigmoid(g[:, 3 * H:4 * H])
        c = f_g * c + i_g * g_g
        h = o_g * jnp.tanh(c)
        hseq_ref[pl.ds(t, 1), :] = h
        return h, c

    h = jnp.zeros((1, H), jnp.float32)
    c = jnp.zeros((1, H), jnp.float32)
    if L <= 32:
        # Short static sequence: fully unroll (straight-line code; maximal LLO
        # scheduling visibility around the serial matmul dependence).
        for t in range(L):
            h, c = step(t, h, c)
    else:
        # TODO(synk): long sequences: chunked unroll keeps compile time bounded.
        h, c = lax.fori_loop(0, L, lambda t, hc: step(t, hc[0], hc[1]),
                             (h, c), unroll=8)

    hn_ref[...] = h
    cn_ref[...] = c


def lstm_layer(x, wih_t, whh_t, b):
    """One LSTM layer; returns (h_seq (L,H), h_n (1,H), c_n (1,H))."""
    L = x.shape[0]
    H = whh_t.shape[0]
    # TODO(synk): at production Din=6144/4H=4096 the wih weight must be K/N
    # tiled with a grid + accumulator; at these sizes everything fits VMEM.
    return pl.pallas_call(
        _lstm_layer_kernel,
        out_shape=(
            jax.ShapeDtypeStruct((L, H), jnp.float32),
            jax.ShapeDtypeStruct((1, H), jnp.float32),
            jax.ShapeDtypeStruct((1, H), jnp.float32),
        ),
        in_specs=[_VMEM, _VMEM, _VMEM, _VMEM],
        out_specs=(_VMEM, _VMEM, _VMEM),
        scratch_shapes=[pltpu.VMEM((L, 4 * H), jnp.float32)],
    )(x, wih_t, whh_t, b)


# ---------------------------------------------------------------------------
# Fused head: ReLU -> Linear(H,F) -> Dropout(identity @ eval) -> ReLU
#             -> Linear(F,C_pad) -> argmax.  Class axis is padded to 128 lanes
#             (padded logits = -1e30) so every store is lane-dense.
# ---------------------------------------------------------------------------
def _head_kernel(h_ref, w1_ref, b1_ref, w2_ref, b2_ref, logits_ref, preds_ref):
    a0 = jnp.maximum(h_ref[...], 0.0).astype(jnp.bfloat16)
    z1 = (jnp.dot(a0, w1_ref[...], preferred_element_type=jnp.float32)
          + b1_ref[...])
    a1 = jnp.maximum(z1, 0.0).astype(jnp.bfloat16)   # Dropout(0.3) is identity at inference
    logits = (jnp.dot(a1, w2_ref[...], preferred_element_type=jnp.float32)
              + b2_ref[...])
    logits_ref[...] = logits

    # argmax over the (padded) class axis, first-occurrence tie-break.
    m = jnp.max(logits, axis=-1, keepdims=True)
    col = lax.broadcasted_iota(jnp.int32, logits.shape, 1).astype(jnp.float32)
    first_max = jnp.min(jnp.where(logits == m, col, jnp.inf),
                        axis=-1, keepdims=True)
    preds_ref[...] = jnp.broadcast_to(first_max.astype(jnp.int32),
                                      preds_ref.shape)


def mlp_head(h, w1_t, b1, w2_t, b2):
    L = h.shape[0]
    FCdim, C = w2_t.shape
    CP = max(128, ((C + 127) // 128) * 128)
    w2p = jnp.zeros((FCdim, CP), w2_t.dtype).at[:, :C].set(w2_t)
    b2p = jnp.full((1, CP), -1e30, jnp.float32).at[:, :C].set(b2)
    logits_p, preds_p = pl.pallas_call(
        _head_kernel,
        out_shape=(
            jax.ShapeDtypeStruct((L, CP), jnp.float32),
            jax.ShapeDtypeStruct((L, CP), jnp.int32),
        ),
        in_specs=[_VMEM] * 5,
        out_specs=(_VMEM, _VMEM),
    )(h, w1_t, b1, w2p, b2p)
    return logits_p[:, :C], preds_p[:, 0]


# ---------------------------------------------------------------------------
# LSTMModel
# ---------------------------------------------------------------------------
class LSTMModel:
    """JAX/Pallas port of the PyTorch LSTMModel forward (inference mode)."""

    def __init__(self, params, bert_hidden_size):
        self.params = params
        self.embeddings = BertEmbedding(bert_hidden_size)
        self.select = SelectItem(0)

    def __call__(self, inputs):
        x = self.embeddings(inputs)          # (B, WL, 8*hidden)
        x = x.reshape(-1, x.shape[-1])       # (B*WL, Ci)  == torch .view

        p = self.params
        h = x
        h_ns, c_ns = [], []
        for layer in p["lstm"]:
            h, h_n, c_n = lstm_layer(h, layer["wih_t"], layer["whh_t"], layer["b"])
            h_ns.append(h_n)
            c_ns.append(c_n)
            # inter-layer LSTM dropout (p=0.3) is identity at inference time
        # Note: h_n/c_n stacked as (num_layers, H) (torch unbatched is (L,1,H)).
        lstm_out = (h, (jnp.concatenate(h_ns, axis=0),
                        jnp.concatenate(c_ns, axis=0)))

        h = self.select(lstm_out)            # SelectItem(0): no kernel, no copy
        logits, preds = mlp_head(h, p["w1_t"], p["b1"], p["w2_t"], p["b2"])
        return logits, preds


# ---------------------------------------------------------------------------
# Parameter init (matmul weights stored bf16) + pure-JAX reference
# ---------------------------------------------------------------------------
def init_params(key, ci, hidden, fc_hidden, num_classes, num_layers=2):
    params = {"lstm": []}
    din = ci
    for _ in range(num_layers):
        key, k1, k2, k3 = jax.random.split(key, 4)
        params["lstm"].append({
            "wih_t": (jax.random.normal(k1, (din, 4 * hidden), jnp.float32)
                      * (din ** -0.5)).astype(jnp.bfloat16),
            "whh_t": (jax.random.normal(k2, (hidden, 4 * hidden), jnp.float32)
                      * (hidden ** -0.5)).astype(jnp.bfloat16),
            "b": jax.random.normal(k3, (1, 4 * hidden), jnp.float32) * 0.01,
        })
        din = hidden
    key, k1, k2, k3, k4 = jax.random.split(key, 5)
    params["w1_t"] = (jax.random.normal(k1, (hidden, fc_hidden), jnp.float32)
                      * (hidden ** -0.5)).astype(jnp.bfloat16)
    params["b1"] = jax.random.normal(k2, (1, fc_hidden), jnp.float32) * 0.01
    params["w2_t"] = (jax.random.normal(k3, (fc_hidden, num_classes), jnp.float32)
                      * (fc_hidden ** -0.5)).astype(jnp.bfloat16)
    params["b2"] = jax.random.normal(k4, (1, num_classes), jnp.float32) * 0.01
    return params


def _bf16_dot(a, b):
    return jnp.dot(a.astype(jnp.bfloat16), b.astype(jnp.bfloat16),
                   preferred_element_type=jnp.float32)


def _ref_lstm_layer(x, wih_t, whh_t, b):
    H = whh_t.shape[0]
    gates_x = _bf16_dot(x, wih_t) + b

    def step(carry, gx):
        h, c = carry
        g = gx + _bf16_dot(h, whh_t)
        i_g = jax.nn.sigmoid(g[:H])
        f_g = jax.nn.sigmoid(g[H:2 * H])
        g_g = jnp.tanh(g[2 * H:3 * H])
        o_g = jax.nn.sigmoid(g[3 * H:])
        c = f_g * c + i_g * g_g
        h = o_g * jnp.tanh(c)
        return (h, c), h

    init = (jnp.zeros((H,), jnp.float32), jnp.zeros((H,), jnp.float32))
    _, hs = lax.scan(step, init, gates_x)
    return hs


def reference_forward(params, inputs):
    BL = inputs["bert_longest_length"]
    WL = inputs["word_longest_length"]
    bert_x = jnp.concatenate(
        [h[:, :BL, :] for h in inputs["bert_hidden_states"][-8:]], axis=-1)
    transforms = inputs["transform_matrix"][:, :WL, :BL]
    emb = jnp.einsum("bwk,bkd->bwd",
                     transforms.astype(jnp.bfloat16),
                     bert_x.astype(jnp.bfloat16),
                     preferred_element_type=jnp.float32)
    x = emb.reshape(-1, emb.shape[-1])
    h = x
    for layer in params["lstm"]:
        h = _ref_lstm_layer(h, layer["wih_t"], layer["whh_t"], layer["b"])
    h = jnp.maximum(h, 0.0)
    z1 = _bf16_dot(h, params["w1_t"]) + params["b1"]
    a1 = jnp.maximum(z1, 0.0)
    logits = _bf16_dot(a1, params["w2_t"]) + params["b2"]
    preds = jnp.argmax(logits, axis=-1).astype(jnp.int32)
    return logits, preds


if __name__ == "__main__":
    # SMALL shapes consistent with the module structure:
    #   BERT hidden = 128 (lane-aligned stand-in for 768) -> Ci = 8*128 = 1024
    #   LSTM hidden = 256 (stand-in for 1024), fc hidden = 128, classes = 16
    #   batch B=2, bert length BL=16, word length WL=8 -> L = B*WL = 16 tokens.
    B, BL, WL = 2, 16, 8
    BERT_H = 128
    CI = 8 * BERT_H
    H = 256
    FC = 128
    C = 16

    key = jax.random.PRNGKey(0)
    key, kp = jax.random.split(key)
    params = init_params(kp, CI, H, FC, C, num_layers=2)

    # TODO(synk): the pretrained BERT encoder cannot be reproduced in-script;
    # its per-layer hidden states are synthesized deterministically here.
    hs_keys = jax.random.split(key, 9)
    hidden_states = tuple(
        jax.random.normal(k, (B, BL, BERT_H), jnp.float32) for k in hs_keys[:-1])
    transform_matrix = jax.random.normal(hs_keys[-1], (B, WL, BL), jnp.float32) / BL

    inputs = {
        "bert_longest_length": BL,
        "word_longest_length": WL,
        "bert_hidden_states": hidden_states,
        "transform_matrix": transform_matrix,
    }

    model = LSTMModel(params, BERT_H)
    logits, preds = model(inputs)
    logits, preds = jax.block_until_ready((logits, preds))

    ref_logits, ref_preds = reference_forward(params, inputs)

    assert logits.shape == (B * WL, C) and logits.dtype == jnp.float32
    assert preds.shape == (B * WL,) and preds.dtype == jnp.int32
    max_err = float(jnp.max(jnp.abs(logits - ref_logits)))
    assert bool(jnp.allclose(logits, ref_logits, rtol=2e-2, atol=2e-2)), max_err
    # In-kernel argmax must agree exactly with jnp.argmax on the same logits.
    assert bool(jnp.all(preds == jnp.argmax(logits, axis=-1).astype(jnp.int32)))
    print("KERNEL_OK")
</pallas_src>

<mosaic_0001>
module attributes {stable_mosaic.version = 11 : i64} {
  func.func @_embed_bmm_kernel(%arg0: i32, %arg1: memref<1x8x16xf32, #tpu.memory_space<vmem>>, %arg2: memref<1x16x128xf32, #tpu.memory_space<vmem>>, %arg3: memref<1x16x128xf32, #tpu.memory_space<vmem>>, %arg4: memref<1x16x128xf32, #tpu.memory_space<vmem>>, %arg5: memref<1x16x128xf32, #tpu.memory_space<vmem>>, %arg6: memref<1x16x128xf32, #tpu.memory_space<vmem>>, %arg7: memref<1x16x128xf32, #tpu.memory_space<vmem>>, %arg8: memref<1x16x128xf32, #tpu.memory_space<vmem>>, %arg9: memref<1x16x128xf32, #tpu.memory_space<vmem>>, %arg10: memref<1x8x1024xf32, #tpu.memory_space<vmem>>) attributes {dimension_semantics = [#tpu.dimension_semantics<parallel>], iteration_bounds = array<i64: 2>, scalar_prefetch = 0 : i64, scratch_operands = 0 : i64, tpu.core_type = #tpu.core_type<tc>, window_params = [{transform_indices = @transform_0, window_bounds = array<i64: 1, 8, 16>}, {transform_indices = @transform_1, window_bounds = array<i64: 1, 16, 128>}, {transform_indices = @transform_2, window_bounds = array<i64: 1, 16, 128>}, {transform_indices = @transform_3, window_bounds = array<i64: 1, 16, 128>}, {transform_indices = @transform_4, window_bounds = array<i64: 1, 16, 128>}, {transform_indices = @transform_5, window_bounds = array<i64: 1, 16, 128>}, {transform_indices = @transform_6, window_bounds = array<i64: 1, 16, 128>}, {transform_indices = @transform_7, window_bounds = array<i64: 1, 16, 128>}, {transform_indices = @transform_8, window_bounds = array<i64: 1, 16, 128>}, {transform_indices = @transform_9, window_bounds = array<i64: 1, 8, 1024>}]} {
    %c0 = arith.constant 0 : index
    %c0_0 = arith.constant 0 : index
    %c0_1 = arith.constant 0 : index
    %0 = vector.load %arg1[%c0, %c0_0, %c0_1] : memref<1x8x16xf32, #tpu.memory_space<vmem>>, vector<1x8x16xf32>
    %1 = vector.shape_cast %0 : vector<1x8x16xf32> to vector<8x16xf32>
    %2 = arith.truncf %1 : vector<8x16xf32> to vector<8x16xbf16>
    %c0_2 = arith.constant 0 : index
    %c0_3 = arith.constant 0 : index
    %c0_4 = arith.constant 0 : index
    %3 = vector.load %arg2[%c0_2, %c0_3, %c0_4] : memref<1x16x128xf32, #tpu.memory_space<vmem>>, vector<1x16x128xf32>
    %4 = vector.shape_cast %3 : vector<1x16x128xf32> to vector<16x128xf32>
    %5 = arith.truncf %4 : vector<16x128xf32> to vector<16x128xbf16>
    %cst = arith.constant dense<0.000000e+00> : vector<8x128xf32>
    %6 = tpu.matmul %2, %5, %cst {dimension_numbers = #tpu.dot_dimension_numbers<[1], [0], [0], [1], [0, 0, 1, 1], [], []>} : vector<8x16xbf16>, vector<16x128xbf16>, vector<8x128xf32> -> vector<8x128xf32>
    %c0_5 = arith.constant 0 : index
    %c0_6 = arith.constant 0 : index
    %c0_7 = arith.constant 0 : index
    %7 = vector.load %arg10[%c0_5, %c0_6, %c0_7] : memref<1x8x1024xf32, #tpu.memory_space<vmem>>, vector<1x8x128xf32>
    %8 = vector.shape_cast %7 : vector<1x8x128xf32> to vector<8x128xf32>
    %9 = vector.shape_cast %6 : vector<8x128xf32> to vector<1x8x128xf32>
    tpu.vector_store %arg10[%c0_5, %c0_6, %c0_7], %9 {strides = array<i32>} : memref<1x8x1024xf32, #tpu.memory_space<vmem>>, vector<1x8x128xf32>,
    %c0_8 = arith.constant 0 : index
    %c0_9 = arith.constant 0 : index
    %c0_10 = arith.constant 0 : index
    %10 = vector.load %arg3[%c0_8, %c0_9, %c0_10] : memref<1x16x128xf32, #tpu.memory_space<vmem>>, vector<1x16x128xf32>
    %11 = vector.shape_cast %10 : vector<1x16x128xf32> to vector<16x128xf32>
    %12 = arith.truncf %11 : vector<16x128xf32> to vector<16x128xbf16>
    %cst_11 = arith.constant dense<0.000000e+00> : vector<8x128xf32>
    %13 = tpu.matmul %2, %12, %cst_11 {dimension_numbers = #tpu.dot_dimension_numbers<[1], [0], [0], [1], [0, 0, 1, 1], [], []>} : vector<8x16xbf16>, vector<16x128xbf16>, vector<8x128xf32> -> vector<8x128xf32>
    %c0_12 = arith.constant 0 : index
    %c0_13 = arith.constant 0 : index
    %c128 = arith.constant 128 : index
    %14 = vector.load %arg10[%c0_12, %c0_13, %c128] : memref<1x8x1024xf32, #tpu.memory_space<vmem>>, vector<1x8x128xf32>
    %15 = vector.shape_cast %14 : vector<1x8x128xf32> to vector<8x128xf32>
    %16 = vector.shape_cast %13 : vector<8x128xf32> to vector<1x8x128xf32>
    tpu.vector_store %arg10[%c0_12, %c0_13, %c128], %16 {strides = array<i32>} : memref<1x8x1024xf32, #tpu.memory_space<vmem>>, vector<1x8x128xf32>,
    %c0_14 = arith.constant 0 : index
    %c0_15 = arith.constant 0 : index
    %c0_16 = arith.constant 0 : index
    %17 = vector.load %arg4[%c0_14, %c0_15, %c0_16] : memref<1x16x128xf32, #tpu.memory_space<vmem>>, vector<1x16x128xf32>
    %18 = vector.shape_cast %17 : vector<1x16x128xf32> to vector<16x128xf32>
    %19 = arith.truncf %18 : vector<16x128xf32> to vector<16x128xbf16>
    %cst_17 = arith.constant dense<0.000000e+00> : vector<8x128xf32>
    %20 = tpu.matmul %2, %19, %cst_17 {dimension_numbers = #tpu.dot_dimension_numbers<[1], [0], [0], [1], [0, 0, 1, 1], [], []>} : vector<8x16xbf16>, vector<16x128xbf16>, vector<8x128xf32> -> vector<8x128xf32>
    %c0_18 = arith.constant 0 : index
    %c0_19 = arith.constant 0 : index
    %c256 = arith.constant 256 : index
    %21 = vector.load %arg10[%c0_18, %c0_19, %c256] : memref<1x8x1024xf32, #tpu.memory_space<vmem>>, vector<1x8x128xf32>
    %22 = vector.shape_cast %21 : vector<1x8x128xf32> to vector<8x128xf32>
    %23 = vector.shape_cast %20 : vector<8x128xf32> to vector<1x8x128xf32>
    tpu.vector_store %arg10[%c0_18, %c0_19, %c256], %23 {strides = array<i32>} : memref<1x8x1024xf32, #tpu.memory_space<vmem>>, vector<1x8x128xf32>,
    %c0_20 = arith.constant 0 : index
    %c0_21 = arith.constant 0 : index
    %c0_22 = arith.constant 0 : index
    %24 = vector.load %arg5[%c0_20, %c0_21, %c0_22] : memref<1x16x128xf32, #tpu.memory_space<vmem>>, vector<1x16x128xf32>
    %25 = vector.shape_cast %24 : vector<1x16x128xf32> to vector<16x128xf32>
    %26 = arith.truncf %25 : vector<16x128xf32> to vector<16x128xbf16>
    %cst_23 = arith.constant dense<0.000000e+00> : vector<8x128xf32>
    %27 = tpu.matmul %2, %26, %cst_23 {dimension_numbers = #tpu.dot_dimension_numbers<[1], [0], [0], [1], [0, 0, 1, 1], [], []>} : vector<8x16xbf16>, vector<16x128xbf16>, vector<8x128xf32> -> vector<8x128xf32>
    %c0_24 = arith.constant 0 : index
    %c0_25 = arith.constant 0 : index
    %c384 = arith.constant 384 : index
    %28 = vector.load %arg10[%c0_24, %c0_25, %c384] : memref<1x8x1024xf32, #tpu.memory_space<vmem>>, vector<1x8x128xf32>
    %29 = vector.shape_cast %28 : vector<1x8x128xf32> to vector<8x128xf32>
    %30 = vector.shape_cast %27 : vector<8x128xf32> to vector<1x8x128xf32>
    tpu.vector_store %arg10[%c0_24, %c0_25, %c384], %30 {strides = array<i32>} : memref<1x8x1024xf32, #tpu.memory_space<vmem>>, vector<1x8x128xf32>,
    %c0_26 = arith.constant 0 : index
    %c0_27 = arith.constant 0 : index
    %c0_28 = arith.constant 0 : index
    %31 = vector.load %arg6[%c0_26, %c0_27, %c0_28] : memref<1x16x128xf32, #tpu.memory_space<vmem>>, vector<1x16x128xf32>
    %32 = vector.shape_cast %31 : vector<1x16x128xf32> to vector<16x128xf32>
    %33 = arith.truncf %32 : vector<16x128xf32> to vector<16x128xbf16>
    %cst_29 = arith.constant dense<0.000000e+00> : vector<8x128xf32>
    %34 = tpu.matmul %2, %33, %cst_29 {dimension_numbers = #tpu.dot_dimension_numbers<[1], [0], [0], [1], [0, 0, 1, 1], [], []>} : vector<8x16xbf16>, vector<16x128xbf16>, vector<8x128xf32> -> vector<8x128xf32>
    %c0_30 = arith.constant 0 : index
    %c0_31 = arith.constant 0 : index
    %c512 = arith.constant 512 : index
    %35 = vector.load %arg10[%c0_30, %c0_31, %c512] : memref<1x8x1024xf32, #tpu.memory_space<vmem>>, vector<1x8x128xf32>
    %36 = vector.shape_cast %35 : vector<1x8x128xf32> to vector<8x128xf32>
    %37 = vector.shape_cast %34 : vector<8x128xf32> to vector<1x8x128xf32>
    tpu.vector_store %arg10[%c0_30, %c0_31, %c512], %37 {strides = array<i32>} : memref<1x8x1024xf32, #tpu.memory_space<vmem>>, vector<1x8x128xf32>,
    %c0_32 = arith.constant 0 : index
    %c0_33 = arith.constant 0 : index
    %c0_34 = arith.constant 0 : index
    %38 = vector.load %arg7[%c0_32, %c0_33, %c0_34] : memref<1x16x128xf32, #tpu.memory_space<vmem>>, vector<1x16x128xf32>
    %39 = vector.shape_cast %38 : vector<1x16x128xf32> to vector<16x128xf32>
    %40 = arith.truncf %39 : vector<16x128xf32> to vector<16x128xbf16>
    %cst_35 = arith.constant dense<0.000000e+00> : vector<8x128xf32>
    %41 = tpu.matmul %2, %40, %cst_35 {dimension_numbers = #tpu.dot_dimension_numbers<[1], [0], [0], [1], [0, 0, 1, 1], [], []>} : vector<8x16xbf16>, vector<16x128xbf16>, vector<8x128xf32> -> vector<8x128xf32>
    %c0_36 = arith.constant 0 : index
    %c0_37 = arith.constant 0 : index
    %c640 = arith.constant 640 : index
    %42 = vector.load %arg10[%c0_36, %c0_37, %c640] : memref<1x8x1024xf32, #tpu.memory_space<vmem>>, vector<1x8x128xf32>
    %43 = vector.shape_cast %42 : vector<1x8x128xf32> to vector<8x128xf32>
    %44 = vector.shape_cast %41 : vector<8x128xf32> to vector<1x8x128xf32>
    tpu.vector_store %arg10[%c0_36, %c0_37, %c640], %44 {strides = array<i32>} : memref<1x8x1024xf32, #tpu.memory_space<vmem>>, vector<1x8x128xf32>,
    %c0_38 = arith.constant 0 : index
    %c0_39 = arith.constant 0 : index
    %c0_40 = arith.constant 0 : index
    %45 = vector.load %arg8[%c0_38, %c0_39, %c0_40] : memref<1x16x128xf32, #tpu.memory_space<vmem>>, vector<1x16x128xf32>
    %46 = vector.shape_cast %45 : vector<1x16x128xf32> to vector<16x128xf32>
    %47 = arith.truncf %46 : vector<16x128xf32> to vector<16x128xbf16>
    %cst_41 = arith.constant dense<0.000000e+00> : vector<8x128xf32>
    %48 = tpu.matmul %2, %47, %cst_41 {dimension_numbers = #tpu.dot_dimension_numbers<[1], [0], [0], [1], [0, 0, 1, 1], [], []>} : vector<8x16xbf16>, vector<16x128xbf16>, vector<8x128xf32> -> vector<8x128xf32>
    %c0_42 = arith.constant 0 : index
    %c0_43 = arith.constant 0 : index
    %c768 = arith.constant 768 : index
    %49 = vector.load %arg10[%c0_42, %c0_43, %c768] : memref<1x8x1024xf32, #tpu.memory_space<vmem>>, vector<1x8x128xf32>
    %50 = vector.shape_cast %49 : vector<1x8x128xf32> to vector<8x128xf32>
    %51 = vector.shape_cast %48 : vector<8x128xf32> to vector<1x8x128xf32>
    tpu.vector_store %arg10[%c0_42, %c0_43, %c768], %51 {strides = array<i32>} : memref<1x8x1024xf32, #tpu.memory_space<vmem>>, vector<1x8x128xf32>,
    %c0_44 = arith.constant 0 : index
    %c0_45 = arith.constant 0 : index
    %c0_46 = arith.constant 0 : index
    %52 = vector.load %arg9[%c0_44, %c0_45, %c0_46] : memref<1x16x128xf32, #tpu.memory_space<vmem>>, vector<1x16x128xf32>
    %53 = vector.shape_cast %52 : vector<1x16x128xf32> to vector<16x128xf32>
    %54 = arith.truncf %53 : vector<16x128xf32> to vector<16x128xbf16>
    %cst_47 = arith.constant dense<0.000000e+00> : vector<8x128xf32>
    %55 = tpu.matmul %2, %54, %cst_47 {dimension_numbers = #tpu.dot_dimension_numbers<[1], [0], [0], [1], [0, 0, 1, 1], [], []>} : vector<8x16xbf16>, vector<16x128xbf16>, vector<8x128xf32> -> vector<8x128xf32>
    %c0_48 = arith.constant 0 : index
    %c0_49 = arith.constant 0 : index
    %c896 = arith.constant 896 : index
    %56 = vector.load %arg10[%c0_48, %c0_49, %c896] : memref<1x8x1024xf32, #tpu.memory_space<vmem>>, vector<1x8x128xf32>
    %57 = vector.shape_cast %56 : vector<1x8x128xf32> to vector<8x128xf32>
    %58 = vector.shape_cast %55 : vector<8x128xf32> to vector<1x8x128xf32>
    tpu.vector_store %arg10[%c0_48, %c0_49, %c896], %58 {strides = array<i32>} : memref<1x8x1024xf32, #tpu.memory_space<vmem>>, vector<1x8x128xf32>,
    return
  }
  func.func @transform_0(%arg0: i32) -> (i32, i32, i32) {
    %c0_i32 = arith.constant 0 : i32
    %c0_i32_0 = arith.constant 0 : i32
    %c0_i32_1 = arith.constant 0 : i32
    return %arg0, %c0_i32, %c0_i32_0 : i32, i32, i32
  }
  func.func @transform_1(%arg0: i32) -> (i32, i32, i32) {
    %c0_i32 = arith.constant 0 : i32
    %c0_i32_0 = arith.constant 0 : i32
    %c0_i32_1 = arith.constant 0 : i32
    return %arg0, %c0_i32, %c0_i32_0 : i32, i32, i32
  }
  func.func @transform_2(%arg0: i32) -> (i32, i32, i32) {
    %c0_i32 = arith.constant 0 : i32
    %c0_i32_0 = arith.constant 0 : i32
    %c0_i32_1 = arith.constant 0 : i32
    return %arg0, %c0_i32, %c0_i32_0 : i32, i32, i32
  }
  func.func @transform_3(%arg0: i32) -> (i32, i32, i32) {
    %c0_i32 = arith.constant 0 : i32
    %c0_i32_0 = arith.constant 0 : i32
    %c0_i32_1 = arith.constant 0 : i32
    return %arg0, %c0_i32, %c0_i32_0 : i32, i32, i32
  }
  func.func @transform_4(%arg0: i32) -> (i32, i32, i32) {
    %c0_i32 = arith.constant 0 : i32
    %c0_i32_0 = arith.constant 0 : i32
    %c0_i32_1 = arith.constant 0 : i32
    return %arg0, %c0_i32, %c0_i32_0 : i32, i32, i32
  }
  func.func @transform_5(%arg0: i32) -> (i32, i32, i32) {
    %c0_i32 = arith.constant 0 : i32
    %c0_i32_0 = arith.constant 0 : i32
    %c0_i32_1 = arith.constant 0 : i32
    return %arg0, %c0_i32, %c0_i32_0 : i32, i32, i32
  }
  func.func @transform_6(%arg0: i32) -> (i32, i32, i32) {
    %c0_i32 = arith.constant 0 : i32
    %c0_i32_0 = arith.constant 0 : i32
    %c0_i32_1 = arith.constant 0 : i32
    return %arg0, %c0_i32, %c0_i32_0 : i32, i32, i32
  }
  func.func @transform_7(%arg0: i32) -> (i32, i32, i32) {
    %c0_i32 = arith.constant 0 : i32
    %c0_i32_0 = arith.constant 0 : i32
    %c0_i32_1 = arith.constant 0 : i32
    return %arg0, %c0_i32, %c0_i32_0 : i32, i32, i32
  }
  func.func @transform_8(%arg0: i32) -> (i32, i32, i32) {
    %c0_i32 = arith.constant 0 : i32
    %c0_i32_0 = arith.constant 0 : i32
    %c0_i32_1 = arith.constant 0 : i32
    return %arg0, %c0_i32, %c0_i32_0 : i32, i32, i32
  }
  func.func @transform_9(%arg0: i32) -> (i32, i32, i32) {
    %c0_i32 = arith.constant 0 : i32
    %c0_i32_0 = arith.constant 0 : i32
    %c0_i32_1 = arith.constant 0 : i32
    return %arg0, %c0_i32, %c0_i32_0 : i32, i32, i32
  }
}

</mosaic_0001>

<llo_original>
// kernel: tpu_custom_call.1
$region0: #{tpu_custom_call.1}
  #allocation0 [shape = 'u32[]', space=smem, size = 0x4, offset = 0x4, fixed_abs, tag = 'smem constant byte address 0x4 - core index']
  #allocation1 [shape = 'u32[144,128]{1,0:T(1,128)}', space=vmem, size = 0x12000, scoped, tag = 'internal scratch']
  %s0 = inlined_call_operand.hbm [shape: f32[2,8,16], index: 0, kind: input, shape index: {}]
  %s1 = inlined_call_operand.hbm [shape: f32[2,16,128], index: 1, kind: input, shape index: {}]
  %s2 = inlined_call_operand.hbm [shape: f32[2,16,128], index: 2, kind: input, shape index: {}]
  %s3 = inlined_call_operand.hbm [shape: f32[2,16,128], index: 3, kind: input, shape index: {}]
  %s4 = inlined_call_operand.hbm [shape: f32[2,16,128], index: 4, kind: input, shape index: {}]
  %s5 = inlined_call_operand.hbm [shape: f32[2,16,128], index: 5, kind: input, shape index: {}]
  %s6 = inlined_call_operand.hbm [shape: f32[2,16,128], index: 6, kind: input, shape index: {}]
  %s7 = inlined_call_operand.hbm [shape: f32[2,16,128], index: 7, kind: input, shape index: {}]
  %s8 = inlined_call_operand.hbm [shape: f32[2,16,128], index: 8, kind: input, shape index: {}]
  %s9 = inlined_call_operand.hbm [shape: f32[2,8,1024], index: 9, kind: output, shape index: {}]
  %s10 = sld [smem:[#allocation0]]
  $region105: #{tpu_custom_call.1} parent=0
    _
  %s12 = ssub.s32 1, %s10
  %s13 = scalar_select 0, %s12, %s10
  $region1: #{tpu_custom_call.1} parent=0
    #allocation2 [shape = 'u8[8192]{0}', space=vmem, size = 0x2000, scoped, tag = 'input window, operand 0']
    #allocation3 [shape = 's32[2]{0}', space=sflag, size = 0x8, scoped, tag = 'scoped memory for tpu_custom_call.1']
    #allocation4 [shape = 's32[2]{0}', space=sflag, size = 0x8, scoped, tag = 'scoped memory for tpu_custom_call.1']
    #allocation5 [shape = 'u8[16384]{0}', space=vmem, size = 0x4000, scoped, tag = 'input window, operand 1']
    #allocation6 [shape = 's32[2]{0}', space=sflag, size = 0x8, scoped, tag = 'scoped memory for tpu_custom_call.1']
    #allocation7 [shape = 'u8[16384]{0}', space=vmem, size = 0x4000, scoped, tag = 'input window, operand 2']
    #allocation8 [shape = 'u8[16384]{0}', space=vmem, size = 0x4000, scoped, tag = 'input window, operand 3']
    #allocation9 [shape = 's32[2]{0}', space=sflag, size = 0x8, scoped, tag = 'scoped memory for tpu_custom_call.1']
    #allocation10 [shape = 'u8[16384]{0}', space=vmem, size = 0x4000, scoped, tag = 'input window, operand 4']
    #allocation11 [shape = 'u8[16384]{0}', space=vmem, size = 0x4000, scoped, tag = 'input window, operand 5']
    #allocation12 [shape = 's32[2]{0}', space=sflag, size = 0x8, scoped, tag = 'scoped memory for tpu_custom_call.1']
    #allocation13 [shape = 'u8[16384]{0}', space=vmem, size = 0x4000, scoped, tag = 'input window, operand 6']
    #allocation14 [shape = 'u8[16384]{0}', space=vmem, size = 0x4000, scoped, tag = 'input window, operand 7']
    #allocation15 [shape = 's32[2]{0}', space=sflag, size = 0x8, scoped, tag = 'scoped memory for tpu_custom_call.1']
    #allocation16 [shape = 'u8[16384]{0}', space=vmem, size = 0x4000, scoped, tag = 'input window, operand 8']
    #allocation17 [shape = 'u8[65536]{0}', space=vmem, size = 0x10000, scoped, tag = 'output window, operand 0']
    %14 = vsyncpa [#allocation3], 0
    %s15 = scalar_lea.sflag [#allocation3], 1
    %16 = vsyncpa %s15, 0
    %17 = vsyncpa [#allocation6], 0
    %s18 = scalar_lea.sflag [#allocation6], 1
    %19 = vsyncpa %s18, 0
    %20 = vsyncpa [#allocation9], 0
    %s21 = scalar_lea.sflag [#allocation9], 1
    %22 = vsyncpa %s21, 0
    %23 = vsyncpa [#allocation12], 0
    %s24 = scalar_lea.sflag [#allocation12], 1
    %25 = vsyncpa %s24, 0
    %26 = vsyncpa [#allocation15], 0
    %s27 = scalar_lea.sflag [#allocation15], 1
    %28 = vsyncpa %s27, 0
    %29 = vsyncpa [#allocation4], 0
    %s30 = scalar_lea.sflag [#allocation4], 1
    %31 = vsyncpa %s30, 0
    loop: start=0, step=1, limit=4
    $region2: #{tpu_custom_call.1} parent=1 // loop_pre_header
      _
    $region3: #{tpu_custom_call.1} parent=1 // loop_header
      %s33 = sphi 0, %s37
      %p34 = scmp.ge.s32.totalorder %s33, 4
      %s43 = sphi 0, %s45
      %s46 = sphi 0, %s43
      %s47 = sphi 0, %s46
      %s63 = sphi 0, %s47
      %s69 = sphi 0, %s71
      %s72 = sphi 0, %s69
      %s73 = sphi 0, %s72
      %s89 = sphi 0, %s73
      %s95 = sphi 0, %s97
      %s98 = sphi 0, %s95
      %s99 = sphi 0, %s98
      %s115 = sphi 0, %s99
      %s121 = sphi 0, %s123
      %s124 = sphi 0, %s121
      %s125 = sphi 0, %s124
      %s141 = sphi 0, %s125
      %s147 = sphi 0, %s149
      %s150 = sphi 0, %s147
      %s151 = sphi 0, %s150
      %s167 = sphi 0, %s151
      %s173 = sphi 0, %s175
      %s176 = sphi 0, %s173
      %s177 = sphi 0, %s176
      %s193 = sphi 0, %s177
      %s199 = sphi 0, %s201
      %s202 = sphi 0, %s199
      %s203 = sphi 0, %s202
      %s219 = sphi 0, %s203
      %s225 = sphi 0, %s227
      %s228 = sphi 0, %s225
      %s229 = sphi 0, %s228
      %s245 = sphi 0, %s229
      %s251 = sphi 0, %s253
      %s254 = sphi 0, %s251
      %s255 = sphi 0, %s254
      %s271 = sphi 0, %s255
      %s277 = sphi 0, %s279
      %s280 = sphi 0, %s277
      %s281 = sphi 0, %s280
      %s297 = sphi 0, %s281
    $region4: #{tpu_custom_call.1} parent=1 // loop_header_branch
      %36 = sbr.rel (%p34) target = $region8
    $region5: #{tpu_custom_call.1} parent=1 // loop_body
      %s38 = ssub.s32 %s33, 1
      %s39 = ssub.s32 %s33, 2
      %s40 = sadd.s32 %s33, 1
      %s41 = ssub.s32 %s33, %s40
      %p42 = scmp.eq.s32.totalorder %s41, 0
      %s44 = sadd.s32 %s43, 1
      %s45 = scalar_select %p42, %s43, %s44
      %p48 = pneg %p42
      %p49 = scmp.eq.s32.totalorder %s33, 1
      %p50 = por %p48, %p49
      %p51 = scmp.ne.s32.totalorder %s43, %s46
      %p52 = scmp.eq.s32.totalorder %s33, 0
      %p53 = por %p51, %p52
      %p54 = scmp.ne.s32.totalorder %s43, %s46
      %p55 = scmp.eq.s32.totalorder %s38, 1
      %p56 = por %p54, %p55
      %p57 = scmp.ne.s32.totalorder %s46, %s47
      %p58 = scmp.eq.s32.totalorder %s38, 0
      %p59 = por %p57, %p58
      %p60 = scmp.ne.s32.totalorder %s46, %s47
      %p61 = scmp.eq.s32.totalorder %s39, 1
      %p62 = por %p60, %p61
      %p64 = scmp.ne.s32.totalorder %s47, %s63
      %p65 = scmp.eq.s32.totalorder %s39, 0
      %p66 = por %p64, %p65
      %s67 = ssub.s32 %s33, %s40
      %p68 = scmp.eq.s32.totalorder %s67, 0
      %s70 = sadd.s32 %s69, 1
      %s71 = scalar_select %p68, %s69, %s70
      %p74 = pneg %p68
      %p75 = scmp.eq.s32.totalorder %s33, 1
      %p76 = por %p74, %p75
      %p77 = scmp.ne.s32.totalorder %s69, %s72
      %p78 = scmp.eq.s32.totalorder %s33, 0
      %p79 = por %p77, %p78
      %p80 = scmp.ne.s32.totalorder %s69, %s72
      %p81 = scmp.eq.s32.totalorder %s38, 1
      %p82 = por %p80, %p81
      %p83 = scmp.ne.s32.totalorder %s72, %s73
      %p84 = scmp.eq.s32.totalorder %s38, 0
      %p85 = por %p83, %p84
      %p86 = scmp.ne.s32.totalorder %s72, %s73
      %p87 = scmp.eq.s32.totalorder %s39, 1
      %p88 = por %p86, %p87
      %p90 = scmp.ne.s32.totalorder %s73, %s89
      %p91 = scmp.eq.s32.totalorder %s39, 0
      %p92 = por %p90, %p91
      %s93 = ssub.s32 %s33, %s40
      %p94 = scmp.eq.s32.totalorder %s93, 0
      %s96 = sadd.s32 %s95, 1
      %s97 = scalar_select %p94, %s95, %s96
      %p100 = pneg %p94
      %p101 = scmp.eq.s32.totalorder %s33, 1
      %p102 = por %p100, %p101
      %p103 = scmp.ne.s32.totalorder %s95, %s98
      %p104 = scmp.eq.s32.totalorder %s33, 0
      %p105 = por %p103, %p104
      %p106 = scmp.ne.s32.totalorder %s95, %s98
      %p107 = scmp.eq.s32.totalorder %s38, 1
      %p108 = por %p106, %p107
      %p109 = scmp.ne.s32.totalorder %s98, %s99
      %p110 = scmp.eq.s32.totalorder %s38, 0
      %p111 = por %p109, %p110
      %p112 = scmp.ne.s32.totalorder %s98, %s99
      %p113 = scmp.eq.s32.totalorder %s39, 1
      %p114 = por %p112, %p113
      %p116 = scmp.ne.s32.totalorder %s99, %s115
      %p117 = scmp.eq.s32.totalorder %s39, 0
      %p118 = por %p116, %p117
      %s119 = ssub.s32 %s33, %s40
      %p120 = scmp.eq.s32.totalorder %s119, 0
      %s122 = sadd.s32 %s121, 1
      %s123 = scalar_select %p120, %s121, %s122
      %p126 = pneg %p120
      %p127 = scmp.eq.s32.totalorder %s33, 1
      %p128 = por %p126, %p127
      %p129 = scmp.ne.s32.totalorder %s121, %s124
      %p130 = scmp.eq.s32.totalorder %s33, 0
      %p131 = por %p129, %p130
      %p132 = scmp.ne.s32.totalorder %s121, %s124
      %p133 = scmp.eq.s32.totalorder %s38, 1
      %p134 = por %p132, %p133
      %p135 = scmp.ne.s32.totalorder %s124, %s125
      %p136 = scmp.eq.s32.totalorder %s38, 0
      %p137 = por %p135, %p136
      %p138 = scmp.ne.s32.totalorder %s124, %s125
      %p139 = scmp.eq.s32.totalorder %s39, 1
      %p140 = por %p138, %p139
      %p142 = scmp.ne.s32.totalorder %s125, %s141
      %p143 = scmp.eq.s32.totalorder %s39, 0
      %p144 = por %p142, %p143
      %s145 = ssub.s32 %s33, %s40
      %p146 = scmp.eq.s32.totalorder %s145, 0
      %s148 = sadd.s32 %s147, 1
      %s149 = scalar_select %p146, %s147, %s148
      %p152 = pneg %p146
      %p153 = scmp.eq.s32.totalorder %s33, 1
      %p154 = por %p152, %p153
      %p155 = scmp.ne.s32.totalorder %s147, %s150
      %p156 = scmp.eq.s32.totalorder %s33, 0
      %p157 = por %p155, %p156
      %p158 = scmp.ne.s32.totalorder %s147, %s150
      %p159 = scmp.eq.s32.totalorder %s38, 1
      %p160 = por %p158, %p159
      %p161 = scmp.ne.s32.totalorder %s150, %s151
      %p162 = scmp.eq.s32.totalorder %s38, 0
      %p163 = por %p161, %p162
      %p164 = scmp.ne.s32.totalorder %s150, %s151
      %p165 = scmp.eq.s32.totalorder %s39, 1
      %p166 = por %p164, %p165
      %p168 = scmp.ne.s32.totalorder %s151, %s167
      %p169 = scmp.eq.s32.totalorder %s39, 0
      %p170 = por %p168, %p169
      %s171 = ssub.s32 %s33, %s40
      %p172 = scmp.eq.s32.totalorder %s171, 0
      %s174 = sadd.s32 %s173, 1
      %s175 = scalar_select %p172, %s173, %s174
      %p178 = pneg %p172
      %p179 = scmp.eq.s32.totalorder %s33, 1
      %p180 = por %p178, %p179
      %p181 = scmp.ne.s32.totalorder %s173, %s176
      %p182 = scmp.eq.s32.totalorder %s33, 0
      %p183 = por %p181, %p182
      %p184 = scmp.ne.s32.totalorder %s173, %s176
      %p185 = scmp.eq.s32.totalorder %s38, 1
      %p186 = por %p184, %p185
      %p187 = scmp.ne.s32.totalorder %s176, %s177
      %p188 = scmp.eq.s32.totalorder %s38, 0
      %p189 = por %p187, %p188
      %p190 = scmp.ne.s32.totalorder %s176, %s177
      %p191 = scmp.eq.s32.totalorder %s39, 1
      %p192 = por %p190, %p191
      %p194 = scmp.ne.s32.totalorder %s177, %s193
      %p195 = scmp.eq.s32.totalorder %s39, 0
      %p196 = por %p194, %p195
      %s197 = ssub.s32 %s33, %s40
      %p198 = scmp.eq.s32.totalorder %s197, 0
      %s200 = sadd.s32 %s199, 1
      %s201 = scalar_select %p198, %s199, %s200
      %p204 = pneg %p198
      %p205 = scmp.eq.s32.totalorder %s33, 1
      %p206 = por %p204, %p205
      %p207 = scmp.ne.s32.totalorder %s199, %s202
      %p208 = scmp.eq.s32.totalorder %s33, 0
      %p209 = por %p207, %p208
      %p210 = scmp.ne.s32.totalorder %s199, %s202
      %p211 = scmp.eq.s32.totalorder %s38, 1
      %p212 = por %p210, %p211
      %p213 = scmp.ne.s32.totalorder %s202, %s203
      %p214 = scmp.eq.s32.totalorder %s38, 0
      %p215 = por %p213, %p214
      %p216 = scmp.ne.s32.totalorder %s202, %s203
      %p217 = scmp.eq.s32.totalorder %s39, 1
      %p218 = por %p216, %p217
      %p220 = scmp.ne.s32.totalorder %s203, %s219
      %p221 = scmp.eq.s32.totalorder %s39, 0
      %p222 = por %p220, %p221
      %s223 = ssub.s32 %s33, %s40
      %p224 = scmp.eq.s32.totalorder %s223, 0
      %s226 = sadd.s32 %s225, 1
      %s227 = scalar_select %p224, %s225, %s226
      %p230 = pneg %p224
      %p231 = scmp.eq.s32.totalorder %s33, 1
      %p232 = por %p230, %p231
      %p233 = scmp.ne.s32.totalorder %s225, %s228
      %p234 = scmp.eq.s32.totalorder %s33, 0
      %p235 = por %p233, %p234
      %p236 = scmp.ne.s32.totalorder %s225, %s228
      %p237 = scmp.eq.s32.totalorder %s38, 1
      %p238 = por %p236, %p237
      %p239 = scmp.ne.s32.totalorder %s228, %s229
      %p240 = scmp.eq.s32.totalorder %s38, 0
      %p241 = por %p239, %p240
      %p242 = scmp.ne.s32.totalorder %s228, %s229
      %p243 = scmp.eq.s32.totalorder %s39, 1
      %p244 = por %p242, %p243
      %p246 = scmp.ne.s32.totalorder %s229, %s245
      %p247 = scmp.eq.s32.totalorder %s39, 0
      %p248 = por %p246, %p247
      %s249 = ssub.s32 %s33, %s40
      %p250 = scmp.eq.s32.totalorder %s249, 0
      %s252 = sadd.s32 %s251, 1
      %s253 = scalar_select %p250, %s251, %s252
      %p256 = pneg %p250
      %p257 = scmp.eq.s32.totalorder %s33, 1
      %p258 = por %p256, %p257
      %p259 = scmp.ne.s32.totalorder %s251, %s254
      %p260 = scmp.eq.s32.totalorder %s33, 0
      %p261 = por %p259, %p260
      %p262 = scmp.ne.s32.totalorder %s251, %s254
      %p263 = scmp.eq.s32.totalorder %s38, 1
      %p264 = por %p262, %p263
      %p265 = scmp.ne.s32.totalorder %s254, %s255
      %p266 = scmp.eq.s32.totalorder %s38, 0
      %p267 = por %p265, %p266
      %p268 = scmp.ne.s32.totalorder %s254, %s255
      %p269 = scmp.eq.s32.totalorder %s39, 1
      %p270 = por %p268, %p269
      %p272 = scmp.ne.s32.totalorder %s255, %s271
      %p273 = scmp.eq.s32.totalorder %s39, 0
      %p274 = por %p272, %p273
      %s275 = ssub.s32 %s33, %s40
      %p276 = scmp.eq.s32.totalorder %s275, 0
      %s278 = sadd.s32 %s277, 1
      %s279 = scalar_select %p276, %s277, %s278
      %p282 = pneg %p276
      %p283 = scmp.eq.s32.totalorder %s33, 1
      %p284 = por %p282, %p283
      %p285 = scmp.ne.s32.totalorder %s277, %s280
      %p286 = scmp.eq.s32.totalorder %s33, 0
      %p287 = por %p285, %p286
      %p288 = scmp.ne.s32.totalorder %s277, %s280
      %p289 = scmp.eq.s32.totalorder %s38, 1
      %p290 = por %p288, %p289
      %p291 = scmp.ne.s32.totalorder %s280, %s281
      %p292 = scmp.eq.s32.totalorder %s38, 0
      %p293 = por %p291, %p292
      %p294 = scmp.ne.s32.totalorder %s280, %s281
      %p295 = scmp.eq.s32.totalorder %s39, 1
      %p296 = por %p294, %p295
      %p298 = scmp.ne.s32.totalorder %s281, %s297
      %p299 = scmp.eq.s32.totalorder %s39, 0
      %p300 = por %p298, %p299
      %p301 = scmp.le.s32.totalorder 1, %s33
      %p302 = scmp.lt.s32.totalorder %s33, 3
      %p303 = pnand %p301, %p302
      %p304 = pneg %p303
      // Predicated region
      $region9: #{tpu_custom_call.1} parent=5 // pred_check
        _
      $region10: #{tpu_custom_call.1} parent=5 // pred_check_branch
        %306 = sbr.rel (%p303) target = $region12
      $region11: #{tpu_custom_call.1} parent=5 // pred_region
        %s307 = ssub.s32 %s33, 1
      $region12: #{tpu_custom_call.1} parent=5 // pred_fallthru
        _
      %p308 = scmp.lt.s32.totalorder %s33, 2
      // Predicated region
      $region13: #{tpu_custom_call.1} parent=5 // pred_check
        %p309 = pneg %p308
      $region14: #{tpu_custom_call.1} parent=5 // pred_check_branch
        %311 = sbr.rel (%p309) target = $region16
      $region15: #{tpu_custom_call.1} parent=5 // pred_region
        // Predicated region
        $region17: #{tpu_custom_call.1} parent=15 // pred_check
          %p312 = pneg %p53
        $region18: #{tpu_custom_call.1} parent=15 // pred_check_branch
          %314 = sbr.rel (%p312) target = $region20
        $region19: #{tpu_custom_call.1} parent=15 // pred_region
          %s315 = sand.u32 %s43, 1
          %s316 = scalar_lea.sflag [#allocation3], %s315
          %s317 = sand.u32 %s43, 1
          %s318 = smul.addr %s317, 8
          %s319 = scalar_lea.vmem [#allocation2], %s318
          %s321 = ssub.s32 128, 128
          %322 = vsyncadd %s316, %s321
          %s323 = smul.addr %s33, 128
          %s324 = scalar_lea.hbm %s0, %s323
          %s326 = sshll.u32 %s319, 4
          %s327 = int_to_ptr.vmem [resolvable:$true] %s326
          %329 = dma.hbm_to_vmem [thread:$0]  %s324, 128, %s327, %s316
        $region20: #{tpu_custom_call.1} parent=15 // pred_fallthru
          _
        // Predicated region
        $region21: #{tpu_custom_call.1} parent=15 // pred_check
          %p330 = pneg %p79
        $region22: #{tpu_custom_call.1} parent=15 // pred_check_branch
          %332 = sbr.rel (%p330) target = $region24
        $region23: #{tpu_custom_call.1} parent=15 // pred_region
          %s333 = sand.u32 %s33, 1
          %s334 = scalar_lea.sflag [#allocation6], %s333
          %s335 = sand.u32 %s69, 1
          %s336 = smul.addr %s335, 16
          %s337 = scalar_lea.vmem [#allocation5], %s336
          %s339 = ssub.s32 256, 256
          %340 = vsyncadd %s334, %s339
          %s341 = smul.addr %s33, 2
          %s342 = smul.addr %s341, 128
          %s343 = scalar_lea.hbm %s1, %s342
          %s344 = sshll.u32 %s337, 4
          %s345 = int_to_ptr.vmem [resolvable:$true] %s344
          %350 = dma.hbm_to_vmem [thread:$0]  %s343, 256, %s345, %s334, 128, 128, 8
        $region24: #{tpu_custom_call.1} parent=15 // pred_fallthru
          _
        // Predicated region
        $region25: #{tpu_custom_call.1} parent=15 // pred_check
          %p351 = pneg %p105
        $region26: #{tpu_custom_call.1} parent=15 // pred_check_branch
          %353 = sbr.rel (%p351) target = $region28
        $region27: #{tpu_custom_call.1} parent=15 // pred_region
          %s354 = sand.u32 %s33, 1
          %s355 = scalar_lea.sflag [#allocation6], %s354
          %s356 = sand.u32 %s95, 1
          %s357 = smul.addr %s356, 16
          %s358 = scalar_lea.vmem [#allocation7], %s357
          %s360 = ssub.s32 256, 256
          %361 = vsyncadd %s355, %s360
          %s362 = smul.addr %s33, 2
          %s363 = smul.addr %s362, 128
          %s364 = scalar_lea.hbm %s2, %s363
          %s365 = sshll.u32 %s358, 4
          %s366 = int_to_ptr.vmem [resolvable:$true] %s365
          %371 = dma.hbm_to_vmem [thread:$0]  %s364, 256, %s366, %s355, 128, 128, 8
        $region28: #{tpu_custom_call.1} parent=15 // pred_fallthru
          _
        // Predicated region
        $region29: #{tpu_custom_call.1} parent=15 // pred_check
          %p372 = pneg %p131
        $region30: #{tpu_custom_call.1} parent=15 // pred_check_branch
          %374 = sbr.rel (%p372) target = $region32
        $region31: #{tpu_custom_call.1} parent=15 // pred_region
          %s375 = sand.u32 %s33, 1
          %s376 = scalar_lea.sflag [#allocation9], %s375
          %s377 = sand.u32 %s121, 1
          %s378 = smul.addr %s377, 16
          %s379 = scalar_lea.vmem [#allocation8], %s378
          %s381 = ssub.s32 256, 256
          %382 = vsyncadd %s376, %s381
          %s383 = smul.addr %s33, 2
          %s384 = smul.addr %s383, 128
          %s385 = scalar_lea.hbm %s3, %s384
          %s386 = sshll.u32 %s379, 4
          %s387 = int_to_ptr.vmem [resolvable:$true] %s386
          %392 = dma.hbm_to_vmem [thread:$0]  %s385, 256, %s387, %s376, 128, 128, 8
        $region32: #{tpu_custom_call.1} parent=15 // pred_fallthru
          _
        // Predicated region
        $region33: #{tpu_custom_call.1} parent=15 // pred_check
          %p393 = pneg %p157
        $region34: #{tpu_custom_call.1} parent=15 // pred_check_branch
          %395 = sbr.rel (%p393) target = $region36
        $region35: #{tpu_custom_call.1} parent=15 // pred_region
          %s396 = sand.u32 %s33, 1
          %s397 = scalar_lea.sflag [#allocation9], %s396
          %s398 = sand.u32 %s147, 1
          %s399 = smul.addr %s398, 16
          %s400 = scalar_lea.vmem [#allocation10], %s399
          %s402 = ssub.s32 256, 256
          %403 = vsyncadd %s397, %s402
          %s404 = smul.addr %s33, 2
          %s405 = smul.addr %s404, 128
          %s406 = scalar_lea.hbm %s4, %s405
          %s407 = sshll.u32 %s400, 4
          %s408 = int_to_ptr.vmem [resolvable:$true] %s407
          %413 = dma.hbm_to_vmem [thread:$0]  %s406, 256, %s408, %s397, 128, 128, 8
        $region36: #{tpu_custom_call.1} parent=15 // pred_fallthru
          _
        // Predicated region
        $region37: #{tpu_custom_call.1} parent=15 // pred_check
          %p414 = pneg %p183
        $region38: #{tpu_custom_call.1} parent=15 // pred_check_branch
          %416 = sbr.rel (%p414) target = $region40
        $region39: #{tpu_custom_call.1} parent=15 // pred_region
          %s417 = sand.u32 %s33, 1
          %s418 = scalar_lea.sflag [#allocation12], %s417
          %s419 = sand.u32 %s173, 1
          %s420 = smul.addr %s419, 16
          %s421 = scalar_lea.vmem [#allocation11], %s420
          %s423 = ssub.s32 256, 256
          %424 = vsyncadd %s418, %s423
          %s425 = smul.addr %s33, 2
          %s426 = smul.addr %s425, 128
          %s427 = scalar_lea.hbm %s5, %s426
          %s428 = sshll.u32 %s421, 4
          %s429 = int_to_ptr.vmem [resolvable:$true] %s428
          %434 = dma.hbm_to_vmem [thread:$0]  %s427, 256, %s429, %s418, 128, 128, 8
        $region40: #{tpu_custom_call.1} parent=15 // pred_fallthru
          _
        // Predicated region
        $region41: #{tpu_custom_call.1} parent=15 // pred_check
          %p435 = pneg %p209
        $region42: #{tpu_custom_call.1} parent=15 // pred_check_branch
          %437 = sbr.rel (%p435) target = $region44
        $region43: #{tpu_custom_call.1} parent=15 // pred_region
          %s438 = sand.u32 %s33, 1
          %s439 = scalar_lea.sflag [#allocation12], %s438
          %s440 = sand.u32 %s199, 1
          %s441 = smul.addr %s440, 16
          %s442 = scalar_lea.vmem [#allocation13], %s441
          %s444 = ssub.s32 256, 256
          %445 = vsyncadd %s439, %s444
          %s446 = smul.addr %s33, 2
          %s447 = smul.addr %s446, 128
          %s448 = scalar_lea.hbm %s6, %s447
          %s449 = sshll.u32 %s442, 4
          %s450 = int_to_ptr.vmem [resolvable:$true] %s449
          %455 = dma.hbm_to_vmem [thread:$0]  %s448, 256, %s450, %s439, 128, 128, 8
        $region44: #{tpu_custom_call.1} parent=15 // pred_fallthru
          _
        // Predicated region
        $region45: #{tpu_custom_call.1} parent=15 // pred_check
          %p456 = pneg %p235
        $region46: #{tpu_custom_call.1} parent=15 // pred_check_branch
          %458 = sbr.rel (%p456) target = $region48
        $region47: #{tpu_custom_call.1} parent=15 // pred_region
          %s459 = sand.u32 %s33, 1
          %s460 = scalar_lea.sflag [#allocation15], %s459
          %s461 = sand.u32 %s225, 1
          %s462 = smul.addr %s461, 16
          %s463 = scalar_lea.vmem [#allocation14], %s462
          %s465 = ssub.s32 256, 256
          %466 = vsyncadd %s460, %s465
          %s467 = smul.addr %s33, 2
          %s468 = smul.addr %s467, 128
          %s469 = scalar_lea.hbm %s7, %s468
          %s470 = sshll.u32 %s463, 4
          %s471 = int_to_ptr.vmem [resolvable:$true] %s470
          %476 = dma.hbm_to_vmem [thread:$0]  %s469, 256, %s471, %s460, 128, 128, 8
        $region48: #{tpu_custom_call.1} parent=15 // pred_fallthru
          _
        // Predicated region
        $region49: #{tpu_custom_call.1} parent=15 // pred_check
          %p477 = pneg %p261
        $region50: #{tpu_custom_call.1} parent=15 // pred_check_branch
          %479 = sbr.rel (%p477) target = $region52
        $region51: #{tpu_custom_call.1} parent=15 // pred_region
          %s480 = sand.u32 %s33, 1
          %s481 = scalar_lea.sflag [#allocation15], %s480
          %s482 = sand.u32 %s251, 1
          %s483 = smul.addr %s482, 16
          %s484 = scalar_lea.vmem [#allocation16], %s483
          %s486 = ssub.s32 256, 256
          %487 = vsyncadd %s481, %s486
          %s488 = smul.addr %s33, 2
          %s489 = smul.addr %s488, 128
          %s490 = scalar_lea.hbm %s8, %s489
          %s491 = sshll.u32 %s484, 4
          %s492 = int_to_ptr.vmem [resolvable:$true] %s491
          %497 = dma.hbm_to_vmem [thread:$0]  %s490, 256, %s492, %s481, 128, 128, 8
        $region52: #{tpu_custom_call.1} parent=15 // pred_fallthru
          _
      $region16: #{tpu_custom_call.1} parent=5 // pred_fallthru
        _
      %p498 = scmp.le.s32.totalorder 1, %s33
      %p499 = scmp.lt.s32.totalorder %s33, 3
      %p500 = pnand %p498, %p499
      %p501 = pneg %p500
      // Predicated region
      $region53: #{tpu_custom_call.1} parent=5 // pred_check
        _
      $region54: #{tpu_custom_call.1} parent=5 // pred_check_branch
        %503 = sbr.rel (%p500) target = $region56
      $region55: #{tpu_custom_call.1} parent=5 // pred_region
        %s504 = ssub.s32 %s33, 1
        %s505 = sand.u32 %s46, 1
        %s506 = scalar_lea.sflag [#allocation3], %s505
        %s507 = sand.u32 %s46, 1
        %s508 = smul.addr %s507, 8
        %s509 = scalar_lea.vmem [#allocation2], %s508
        // Predicated region
        $region57: #{tpu_custom_call.1} parent=55 // pred_check
          %p510 = pneg %p59
        $region58: #{tpu_custom_call.1} parent=55 // pred_check_branch
          %512 = sbr.rel (%p510) target = $region60
        $region59: #{tpu_custom_call.1} parent=55 // pred_region
          %513 = dma.done %s506, 128
        $region60: #{tpu_custom_call.1} parent=55 // pred_fallthru
          _
        %s514 = sand.u32 %s38, 1
        %s515 = scalar_lea.sflag [#allocation6], %s514
        %s516 = sand.u32 %s72, 1
        %s517 = smul.addr %s516, 16
        %s518 = scalar_lea.vmem [#allocation5], %s517
        // Predicated region
        $region61: #{tpu_custom_call.1} parent=55 // pred_check
          %p519 = pneg %p85
        $region62: #{tpu_custom_call.1} parent=55 // pred_check_branch
          %521 = sbr.rel (%p519) target = $region64
        $region63: #{tpu_custom_call.1} parent=55 // pred_region
          %522 = dma.done %s515, 256
        $region64: #{tpu_custom_call.1} parent=55 // pred_fallthru
          _
        %s523 = sand.u32 %s38, 1
        %s524 = scalar_lea.sflag [#allocation6], %s523
        %s525 = sand.u32 %s98, 1
        %s526 = smul.addr %s525, 16
        %s527 = scalar_lea.vmem [#allocation7], %s526
        // Predicated region
        $region65: #{tpu_custom_call.1} parent=55 // pred_check
          %p528 = pneg %p111
        $region66: #{tpu_custom_call.1} parent=55 // pred_check_branch
          %530 = sbr.rel (%p528) target = $region68
        $region67: #{tpu_custom_call.1} parent=55 // pred_region
          %531 = dma.done %s524, 256
        $region68: #{tpu_custom_call.1} parent=55 // pred_fallthru
          _
        %s532 = sand.u32 %s38, 1
        %s533 = scalar_lea.sflag [#allocation9], %s532
        %s534 = sand.u32 %s124, 1
        %s535 = smul.addr %s534, 16
        %s536 = scalar_lea.vmem [#allocation8], %s535
        // Predicated region
        $region69: #{tpu_custom_call.1} parent=55 // pred_check
          %p537 = pneg %p137
        $region70: #{tpu_custom_call.1} parent=55 // pred_check_branch
          %539 = sbr.rel (%p537) target = $region72
        $region71: #{tpu_custom_call.1} parent=55 // pred_region
          %540 = dma.done %s533, 256
        $region72: #{tpu_custom_call.1} parent=55 // pred_fallthru
          _
        %s541 = sand.u32 %s38, 1
        %s542 = scalar_lea.sflag [#allocation9], %s541
        %s543 = sand.u32 %s150, 1
        %s544 = smul.addr %s543, 16
        %s545 = scalar_lea.vmem [#allocation10], %s544
        // Predicated region
        $region73: #{tpu_custom_call.1} parent=55 // pred_check
          %p546 = pneg %p163
        $region74: #{tpu_custom_call.1} parent=55 // pred_check_branch
          %548 = sbr.rel (%p546) target = $region76
        $region75: #{tpu_custom_call.1} parent=55 // pred_region
          %549 = dma.done %s542, 256
        $region76: #{tpu_custom_call.1} parent=55 // pred_fallthru
          _
        %s550 = sand.u32 %s38, 1
        %s551 = scalar_lea.sflag [#allocation12], %s550
        %s552 = sand.u32 %s176, 1
        %s553 = smul.addr %s552, 16
        %s554 = scalar_lea.vmem [#allocation11], %s553
        // Predicated region
        $region77: #{tpu_custom_call.1} parent=55 // pred_check
          %p555 = pneg %p189
        $region78: #{tpu_custom_call.1} parent=55 // pred_check_branch
          %557 = sbr.rel (%p555) target = $region80
        $region79: #{tpu_custom_call.1} parent=55 // pred_region
          %558 = dma.done %s551, 256
        $region80: #{tpu_custom_call.1} parent=55 // pred_fallthru
          _
        %s559 = sand.u32 %s38, 1
        %s560 = scalar_lea.sflag [#allocation12], %s559
        %s561 = sand.u32 %s202, 1
        %s562 = smul.addr %s561, 16
        %s563 = scalar_lea.vmem [#allocation13], %s562
        // Predicated region
        $region81: #{tpu_custom_call.1} parent=55 // pred_check
          %p564 = pneg %p215
        $region82: #{tpu_custom_call.1} parent=55 // pred_check_branch
          %566 = sbr.rel (%p564) target = $region84
        $region83: #{tpu_custom_call.1} parent=55 // pred_region
          %567 = dma.done %s560, 256
        $region84: #{tpu_custom_call.1} parent=55 // pred_fallthru
          _
        %s568 = sand.u32 %s38, 1
        %s569 = scalar_lea.sflag [#allocation15], %s568
        %s570 = sand.u32 %s228, 1
        %s571 = smul.addr %s570, 16
        %s572 = scalar_lea.vmem [#allocation14], %s571
        // Predicated region
        $region85: #{tpu_custom_call.1} parent=55 // pred_check
          %p573 = pneg %p241
        $region86: #{tpu_custom_call.1} parent=55 // pred_check_branch
          %575 = sbr.rel (%p573) target = $region88
        $region87: #{tpu_custom_call.1} parent=55 // pred_region
          %576 = dma.done %s569, 256
        $region88: #{tpu_custom_call.1} parent=55 // pred_fallthru
          _
        %s577 = sand.u32 %s38, 1
        %s578 = scalar_lea.sflag [#allocation15], %s577
        %s579 = sand.u32 %s254, 1
        %s580 = smul.addr %s579, 16
        %s581 = scalar_lea.vmem [#allocation16], %s580
        // Predicated region
        $region89: #{tpu_custom_call.1} parent=55 // pred_check
          %p582 = pneg %p267
        $region90: #{tpu_custom_call.1} parent=55 // pred_check_branch
          %584 = sbr.rel (%p582) target = $region92
        $region91: #{tpu_custom_call.1} parent=55 // pred_region
          %585 = dma.done %s578, 256
        $region92: #{tpu_custom_call.1} parent=55 // pred_fallthru
          _
        %s586 = sand.u32 %s46, 1
        %s587 = scalar_lea.sflag [#allocation3], %s586
        %s588 = sand.u32 %s46, 1
        %s589 = smul.addr %s588, 8
        %s590 = scalar_lea.vmem [#allocation2], %s589
        %p591 = pneg %p59
        %p592 = pneg %p56
        %s593 = sand.u32 %s38, 1
        %s594 = scalar_lea.sflag [#allocation6], %s593
        %s595 = sand.u32 %s72, 1
        %s596 = smul.addr %s595, 16
        %s597 = scalar_lea.vmem [#allocation5], %s596
        %p598 = pneg %p85
        %p599 = pneg %p82
        %s600 = sand.u32 %s38, 1
        %s601 = scalar_lea.sflag [#allocation6], %s600
        %s602 = sand.u32 %s98, 1
        %s603 = smul.addr %s602, 16
        %s604 = scalar_lea.vmem [#allocation7], %s603
        %p605 = pneg %p111
        %p606 = pneg %p108
        %s607 = sand.u32 %s38, 1
        %s608 = scalar_lea.sflag [#allocation9], %s607
        %s609 = sand.u32 %s124, 1
        %s610 = smul.addr %s609, 16
        %s611 = scalar_lea.vmem [#allocation8], %s610
        %p612 = pneg %p137
        %p613 = pneg %p134
        %s614 = sand.u32 %s38, 1
        %s615 = scalar_lea.sflag [#allocation9], %s614
        %s616 = sand.u32 %s150, 1
        %s617 = smul.addr %s616, 16
        %s618 = scalar_lea.vmem [#allocation10], %s617
        %p619 = pneg %p163
        %p620 = pneg %p160
        %s621 = sand.u32 %s38, 1
        %s622 = scalar_lea.sflag [#allocation12], %s621
        %s623 = sand.u32 %s176, 1
        %s624 = smul.addr %s623, 16
        %s625 = scalar_lea.vmem [#allocation11], %s624
        %p626 = pneg %p189
        %p627 = pneg %p186
        %s628 = sand.u32 %s38, 1
        %s629 = scalar_lea.sflag [#allocation12], %s628
        %s630 = sand.u32 %s202, 1
        %s631 = smul.addr %s630, 16
        %s632 = scalar_lea.vmem [#allocation13], %s631
        %p633 = pneg %p215
        %p634 = pneg %p212
        %s635 = sand.u32 %s38, 1
        %s636 = scalar_lea.sflag [#allocation15], %s635
        %s637 = sand.u32 %s228, 1
        %s638 = smul.addr %s637, 16
        %s639 = scalar_lea.vmem [#allocation14], %s638
        %p640 = pneg %p241
        %p641 = pneg %p238
        %s642 = sand.u32 %s38, 1
        %s643 = scalar_lea.sflag [#allocation15], %s642
        %s644 = sand.u32 %s254, 1
        %s645 = smul.addr %s644, 16
        %s646 = scalar_lea.vmem [#allocation16], %s645
        %p647 = pneg %p267
        %p648 = pneg %p264
        %p649 = pneg %p293
        %p650 = pneg %p290
        %s651 = sand.u32 %s280, 1
        %s652 = scalar_lea.sflag [#allocation4], %s651
        %s653 = sand.u32 %s280, 1
        %s654 = smul.addr %s653, 64
        %s655 = scalar_lea.vmem [#allocation17], %s654
        %v657 = vld [vmem:[%s509] sm:$0xff]
        %v658 = vpack.c.bf16 %v657, %v657
        %v659 = vld [vmem:[%s518] sm:$0xff]
        %v660 = vld [vmem:[%s518 + $0x8] sm:$0xff]
        %v661 = vpack.c.bf16 %v660, %v659
        %vm662 = vcmask 130048
        %v664 = vsel %vm662, %v658, 0
        %666 = vmatprep.subr.bf16.mxu0 0
        %667 = vmatpush1.bf16.msra.mxu0 %v661
        %668 = vmatprep.subr.bf16.mxu0 0
        %669 = vmatpush1.bf16.msra.mxu0 0
        %670 = vmatprep.subr.bf16.mxu0 0
        %671 = vmatpush1.bf16.msra.mxu0 0
        %672 = vmatprep.subr.bf16.mxu0 0
        %673 = vmatpush1.bf16.msra.mxu0 0
        %674 = vmatprep.subr.bf16.mxu0 0
        %675 = vmatpush1.bf16.msra.mxu0 0
        %676 = vmatprep.subr.bf16.mxu0 0
        %677 = vmatpush1.bf16.msra.mxu0 0
        %678 = vmatprep.subr.bf16.mxu0 0
        %679 = vmatpush1.bf16.msra.mxu0 0
        %680 = vmatprep.subr.bf16.mxu0 0
        %681 = vmatpush1.bf16.msra.mxu0 0
        %682 = vmatprep.subr.bf16.mxu0 0
        %683 = vmatpush1.bf16.msra.mxu0 0
        %684 = vmatprep.subr.bf16.mxu0 0
        %685 = vmatpush1.bf16.msra.mxu0 0
        %686 = vmatprep.subr.bf16.mxu0 0
        %687 = vmatpush1.bf16.msra.mxu0 0
        %688 = vmatprep.subr.bf16.mxu0 0
        %689 = vmatpush1.bf16.msra.mxu0 0
        %690 = vmatprep.subr.bf16.mxu0 0
        %691 = vmatpush1.bf16.msra.mxu0 0
        %692 = vmatprep.subr.bf16.mxu0 0
        %693 = vmatpush1.bf16.msra.mxu0 0
        %694 = vmatprep.subr.bf16.mxu0 0
        %695 = vmatpush1.bf16.msra.mxu0 0
        %696 = vmatprep.subr.bf16.mxu0 0
        %697 = vmatpush1.bf16.msra.mxu0 0
        %698 = vmatprep.mubr.bf16.mxu0 0
        %699 = vmatmul.mubr.bf16.gmra.mrb[0].mxu0 %v664
        %v700 = vpop.f32.mrb[0].mxu0
        %v701 = vadd.f32 0.0, %v700
        %v702 = vpop.f32.mrb[0].mxu0
        %v703 = vpop.f32.mrb[0].mxu0
        %v704 = vpop.f32.mrb[0].mxu0
        %705 = vdwg.mxu0
        %706 = vst [vmem:[%s655] sm:$0xff] %v701
        %v707 = vld [vmem:[%s527] sm:$0xff]
        %v708 = vld [vmem:[%s527 + $0x8] sm:$0xff]
        %v709 = vpack.c.bf16 %v708, %v707
        %710 = vmatprep.subr.bf16.mxu0 0
        %711 = vmatpush1.bf16.msra.mxu0 %v709
        %712 = vmatprep.subr.bf16.mxu0 0
        %713 = vmatpush1.bf16.msra.mxu0 0
        %714 = vmatprep.subr.bf16.mxu0 0
        %715 = vmatpush1.bf16.msra.mxu0 0
        %716 = vmatprep.subr.bf16.mxu0 0
        %717 = vmatpush1.bf16.msra.mxu0 0
        %718 = vmatprep.subr.bf16.mxu0 0
        %719 = vmatpush1.bf16.msra.mxu0 0
        %720 = vmatprep.subr.bf16.mxu0 0
        %721 = vmatpush1.bf16.msra.mxu0 0
        %722 = vmatprep.subr.bf16.mxu0 0
        %723 = vmatpush1.bf16.msra.mxu0 0
        %724 = vmatprep.subr.bf16.mxu0 0
        %725 = vmatpush1.bf16.msra.mxu0 0
        %726 = vmatprep.subr.bf16.mxu0 0
        %727 = vmatpush1.bf16.msra.mxu0 0
        %728 = vmatprep.subr.bf16.mxu0 0
        %729 = vmatpush1.bf16.msra.mxu0 0
        %730 = vmatprep.subr.bf16.mxu0 0
        %731 = vmatpush1.bf16.msra.mxu0 0
        %732 = vmatprep.subr.bf16.mxu0 0
        %733 = vmatpush1.bf16.msra.mxu0 0
        %734 = vmatprep.subr.bf16.mxu0 0
        %735 = vmatpush1.bf16.msra.mxu0 0
        %736 = vmatprep.subr.bf16.mxu0 0
        %737 = vmatpush1.bf16.msra.mxu0 0
        %738 = vmatprep.subr.bf16.mxu0 0
        %739 = vmatpush1.bf16.msra.mxu0 0
        %740 = vmatprep.subr.bf16.mxu0 0
        %741 = vmatpush1.bf16.msra.mxu0 0
        %742 = vmatprep.mubr.bf16.mxu0 0
        %743 = vmatmul.mubr.bf16.gmra.mrb[0].mxu0 %v664
        %v744 = vpop.f32.mrb[0].mxu0
        %v745 = vadd.f32 0.0, %v744
        %v746 = vpop.f32.mrb[0].mxu0
        %v747 = vpop.f32.mrb[0].mxu0
        %v748 = vpop.f32.mrb[0].mxu0
        %749 = vdwg.mxu0
        %750 = vst [vmem:[%s655 + $0x8] sm:$0xff] %v745
        %v751 = vld [vmem:[%s536] sm:$0xff]
        %v752 = vld [vmem:[%s536 + $0x8] sm:$0xff]
        %v753 = vpack.c.bf16 %v752, %v751
        %754 = vmatprep.subr.bf16.mxu0 0
        %755 = vmatpush1.bf16.msra.mxu0 %v753
        %756 = vmatprep.subr.bf16.mxu0 0
        %757 = vmatpush1.bf16.msra.mxu0 0
        %758 = vmatprep.subr.bf16.mxu0 0
        %759 = vmatpush1.bf16.msra.mxu0 0
        %760 = vmatprep.subr.bf16.mxu0 0
        %761 = vmatpush1.bf16.msra.mxu0 0
        %762 = vmatprep.subr.bf16.mxu0 0
        %763 = vmatpush1.bf16.msra.mxu0 0
        %764 = vmatprep.subr.bf16.mxu0 0
        %765 = vmatpush1.bf16.msra.mxu0 0
        %766 = vmatprep.subr.bf16.mxu0 0
        %767 = vmatpush1.bf16.msra.mxu0 0
        %768 = vmatprep.subr.bf16.mxu0 0
        %769 = vmatpush1.bf16.msra.mxu0 0
        %770 = vmatprep.subr.bf16.mxu0 0
        %771 = vmatpush1.bf16.msra.mxu0 0
        %772 = vmatprep.subr.bf16.mxu0 0
        %773 = vmatpush1.bf16.msra.mxu0 0
        %774 = vmatprep.subr.bf16.mxu0 0
        %775 = vmatpush1.bf16.msra.mxu0 0
        %776 = vmatprep.subr.bf16.mxu0 0
        %777 = vmatpush1.bf16.msra.mxu0 0
        %778 = vmatprep.subr.bf16.mxu0 0
        %779 = vmatpush1.bf16.msra.mxu0 0
        %780 = vmatprep.subr.bf16.mxu0 0
        %781 = vmatpush1.bf16.msra.mxu0 0
        %782 = vmatprep.subr.bf16.mxu0 0
        %783 = vmatpush1.bf16.msra.mxu0 0
        %784 = vmatprep.subr.bf16.mxu0 0
        %785 = vmatpush1.bf16.msra.mxu0 0
        %786 = vmatprep.mubr.bf16.mxu0 0
        %787 = vmatmul.mubr.bf16.gmra.mrb[0].mxu0 %v664
        %v788 = vpop.f32.mrb[0].mxu0
        %v789 = vadd.f32 0.0, %v788
        %v790 = vpop.f32.mrb[0].mxu0
        %v791 = vpop.f32.mrb[0].mxu0
        %v792 = vpop.f32.mrb[0].mxu0
        %793 = vdwg.mxu0
        %794 = vst [vmem:[%s655 + $0x10] sm:$0xff] %v789
        %v795 = vld [vmem:[%s545] sm:$0xff]
        %v796 = vld [vmem:[%s545 + $0x8] sm:$0xff]
        %v797 = vpack.c.bf16 %v796, %v795
        %798 = vmatprep.subr.bf16.mxu0 0
        %799 = vmatpush1.bf16.msra.mxu0 %v797
        %800 = vmatprep.subr.bf16.mxu0 0
        %801 = vmatpush1.bf16.msra.mxu0 0
        %802 = vmatprep.subr.bf16.mxu0 0
        %803 = vmatpush1.bf16.msra.mxu0 0
        %804 = vmatprep.subr.bf16.mxu0 0
        %805 = vmatpush1.bf16.msra.mxu0 0
        %806 = vmatprep.subr.bf16.mxu0 0
        %807 = vmatpush1.bf16.msra.mxu0 0
        %808 = vmatprep.subr.bf16.mxu0 0
        %809 = vmatpush1.bf16.msra.mxu0 0
        %810 = vmatprep.subr.bf16.mxu0 0
        %811 = vmatpush1.bf16.msra.mxu0 0
        %812 = vmatprep.subr.bf16.mxu0 0
        %813 = vmatpush1.bf16.msra.mxu0 0
        %814 = vmatprep.subr.bf16.mxu0 0
        %815 = vmatpush1.bf16.msra.mxu0 0
        %816 = vmatprep.subr.bf16.mxu0 0
        %817 = vmatpush1.bf16.msra.mxu0 0
        %818 = vmatprep.subr.bf16.mxu0 0
        %819 = vmatpush1.bf16.msra.mxu0 0
        %820 = vmatprep.subr.bf16.mxu0 0
        %821 = vmatpush1.bf16.msra.mxu0 0
        %822 = vmatprep.subr.bf16.mxu0 0
        %823 = vmatpush1.bf16.msra.mxu0 0
        %824 = vmatprep.subr.bf16.mxu0 0
        %825 = vmatpush1.bf16.msra.mxu0 0
        %826 = vmatprep.subr.bf16.mxu0 0
        %827 = vmatpush1.bf16.msra.mxu0 0
        %828 = vmatprep.subr.bf16.mxu0 0
        %829 = vmatpush1.bf16.msra.mxu0 0
        %830 = vmatprep.mubr.bf16.mxu0 0
        %831 = vmatmul.mubr.bf16.gmra.mrb[0].mxu0 %v664
        %v832 = vpop.f32.mrb[0].mxu0
        %v833 = vadd.f32 0.0, %v832
        %v834 = vpop.f32.mrb[0].mxu0
        %v835 = vpop.f32.mrb[0].mxu0
        %v836 = vpop.f32.mrb[0].mxu0
        %837 = vdwg.mxu0
        %838 = vst [vmem:[%s655 + $0x18] sm:$0xff] %v833
        %v839 = vld [vmem:[%s554] sm:$0xff]
        %v840 = vld [vmem:[%s554 + $0x8] sm:$0xff]
        %v841 = vpack.c.bf16 %v840, %v839
        %842 = vmatprep.subr.bf16.mxu0 0
        %843 = vmatpush1.bf16.msra.mxu0 %v841
        %844 = vmatprep.subr.bf16.mxu0 0
        %845 = vmatpush1.bf16.msra.mxu0 0
        %846 = vmatprep.subr.bf16.mxu0 0
        %847 = vmatpush1.bf16.msra.mxu0 0
        %848 = vmatprep.subr.bf16.mxu0 0
        %849 = vmatpush1.bf16.msra.mxu0 0
        %850 = vmatprep.subr.bf16.mxu0 0
        %851 = vmatpush1.bf16.msra.mxu0 0
        %852 = vmatprep.subr.bf16.mxu0 0
        %853 = vmatpush1.bf16.msra.mxu0 0
        %854 = vmatprep.subr.bf16.mxu0 0
        %855 = vmatpush1.bf16.msra.mxu0 0
        %856 = vmatprep.subr.bf16.mxu0 0
        %857 = vmatpush1.bf16.msra.mxu0 0
        %858 = vmatprep.subr.bf16.mxu0 0
        %859 = vmatpush1.bf16.msra.mxu0 0
        %860 = vmatprep.subr.bf16.mxu0 0
        %861 = vmatpush1.bf16.msra.mxu0 0
        %862 = vmatprep.subr.bf16.mxu0 0
        %863 = vmatpush1.bf16.msra.mxu0 0
        %864 = vmatprep.subr.bf16.mxu0 0
        %865 = vmatpush1.bf16.msra.mxu0 0
        %866 = vmatprep.subr.bf16.mxu0 0
        %867 = vmatpush1.bf16.msra.mxu0 0
        %868 = vmatprep.subr.bf16.mxu0 0
        %869 = vmatpush1.bf16.msra.mxu0 0
        %870 = vmatprep.subr.bf16.mxu0 0
        %871 = vmatpush1.bf16.msra.mxu0 0
        %872 = vmatprep.subr.bf16.mxu0 0
        %873 = vmatpush1.bf16.msra.mxu0 0
        %874 = vmatprep.mubr.bf16.mxu0 0
        %875 = vmatmul.mubr.bf16.gmra.mrb[0].mxu0 %v664
        %v876 = vpop.f32.mrb[0].mxu0
        %v877 = vadd.f32 0.0, %v876
        %v878 = vpop.f32.mrb[0].mxu0
        %v879 = vpop.f32.mrb[0].mxu0
        %v880 = vpop.f32.mrb[0].mxu0
        %881 = vdwg.mxu0
        %882 = vst [vmem:[%s655 + $0x20] sm:$0xff] %v877
        %v883 = vld [vmem:[%s563] sm:$0xff]
        %v884 = vld [vmem:[%s563 + $0x8] sm:$0xff]
        %v885 = vpack.c.bf16 %v884, %v883
        %886 = vmatprep.subr.bf16.mxu0 0
        %887 = vmatpush1.bf16.msra.mxu0 %v885
        %888 = vmatprep.subr.bf16.mxu0 0
        %889 = vmatpush1.bf16.msra.mxu0 0
        %890 = vmatprep.subr.bf16.mxu0 0
        %891 = vmatpush1.bf16.msra.mxu0 0
        %892 = vmatprep.subr.bf16.mxu0 0
        %893 = vmatpush1.bf16.msra.mxu0 0
        %894 = vmatprep.subr.bf16.mxu0 0
        %895 = vmatpush1.bf16.msra.mxu0 0
        %896 = vmatprep.subr.bf16.mxu0 0
        %897 = vmatpush1.bf16.msra.mxu0 0
        %898 = vmatprep.subr.bf16.mxu0 0
        %899 = vmatpush1.bf16.msra.mxu0 0
        %900 = vmatprep.subr.bf16.mxu0 0
        %901 = vmatpush1.bf16.msra.mxu0 0
        %902 = vmatprep.subr.bf16.mxu0 0
        %903 = vmatpush1.bf16.msra.mxu0 0
        %904 = vmatprep.subr.bf16.mxu0 0
        %905 = vmatpush1.bf16.msra.mxu0 0
        %906 = vmatprep.subr.bf16.mxu0 0
        %907 = vmatpush1.bf16.msra.mxu0 0
        %908 = vmatprep.subr.bf16.mxu0 0
        %909 = vmatpush1.bf16.msra.mxu0 0
        %910 = vmatprep.subr.bf16.mxu0 0
        %911 = vmatpush1.bf16.msra.mxu0 0
        %912 = vmatprep.subr.bf16.mxu0 0
        %913 = vmatpush1.bf16.msra.mxu0 0
        %914 = vmatprep.subr.bf16.mxu0 0
        %915 = vmatpush1.bf16.msra.mxu0 0
        %916 = vmatprep.subr.bf16.mxu0 0
        %917 = vmatpush1.bf16.msra.mxu0 0
        %918 = vmatprep.mubr.bf16.mxu0 0
        %919 = vmatmul.mubr.bf16.gmra.mrb[0].mxu0 %v664
        %v920 = vpop.f32.mrb[0].mxu0
        %v921 = vadd.f32 0.0, %v920
        %v922 = vpop.f32.mrb[0].mxu0
        %v923 = vpop.f32.mrb[0].mxu0
        %v924 = vpop.f32.mrb[0].mxu0
        %925 = vdwg.mxu0
        %926 = vst [vmem:[%s655 + $0x28] sm:$0xff] %v921
        %v927 = vld [vmem:[%s572] sm:$0xff]
        %v928 = vld [vmem:[%s572 + $0x8] sm:$0xff]
        %v929 = vpack.c.bf16 %v928, %v927
        %930 = vmatprep.subr.bf16.mxu0 0
        %931 = vmatpush1.bf16.msra.mxu0 %v929
        %932 = vmatprep.subr.bf16.mxu0 0
        %933 = vmatpush1.bf16.msra.mxu0 0
        %934 = vmatprep.subr.bf16.mxu0 0
        %935 = vmatpush1.bf16.msra.mxu0 0
        %936 = vmatprep.subr.bf16.mxu0 0
        %937 = vmatpush1.bf16.msra.mxu0 0
        %938 = vmatprep.subr.bf16.mxu0 0
        %939 = vmatpush1.bf16.msra.mxu0 0
        %940 = vmatprep.subr.bf16.mxu0 0
        %941 = vmatpush1.bf16.msra.mxu0 0
        %942 = vmatprep.subr.bf16.mxu0 0
        %943 = vmatpush1.bf16.msra.mxu0 0
        %944 = vmatprep.subr.bf16.mxu0 0
        %945 = vmatpush1.bf16.msra.mxu0 0
        %946 = vmatprep.subr.bf16.mxu0 0
        %947 = vmatpush1.bf16.msra.mxu0 0
        %948 = vmatprep.subr.bf16.mxu0 0
        %949 = vmatpush1.bf16.msra.mxu0 0
        %950 = vmatprep.subr.bf16.mxu0 0
        %951 = vmatpush1.bf16.msra.mxu0 0
        %952 = vmatprep.subr.bf16.mxu0 0
        %953 = vmatpush1.bf16.msra.mxu0 0
        %954 = vmatprep.subr.bf16.mxu0 0
        %955 = vmatpush1.bf16.msra.mxu0 0
        %956 = vmatprep.subr.bf16.mxu0 0
        %957 = vmatpush1.bf16.msra.mxu0 0
        %958 = vmatprep.subr.bf16.mxu0 0
        %959 = vmatpush1.bf16.msra.mxu0 0
        %960 = vmatprep.subr.bf16.mxu0 0
        %961 = vmatpush1.bf16.msra.mxu0 0
        %962 = vmatprep.mubr.bf16.mxu0 0
        %963 = vmatmul.mubr.bf16.gmra.mrb[0].mxu0 %v664
        %v964 = vpop.f32.mrb[0].mxu0
        %v965 = vadd.f32 0.0, %v964
        %v966 = vpop.f32.mrb[0].mxu0
        %v967 = vpop.f32.mrb[0].mxu0
        %v968 = vpop.f32.mrb[0].mxu0
        %969 = vdwg.mxu0
        %970 = vst [vmem:[%s655 + $0x30] sm:$0xff] %v965
        %v971 = vld [vmem:[%s581] sm:$0xff]
        %v972 = vld [vmem:[%s581 + $0x8] sm:$0xff]
        %v973 = vpack.c.bf16 %v972, %v971
        %974 = vmatprep.subr.bf16.mxu0 0
        %975 = vmatpush1.bf16.msra.mxu0 %v973
        %976 = vmatprep.subr.bf16.mxu0 0
        %977 = vmatpush1.bf16.msra.mxu0 0
        %978 = vmatprep.subr.bf16.mxu0 0
        %979 = vmatpush1.bf16.msra.mxu0 0
        %980 = vmatprep.subr.bf16.mxu0 0
        %981 = vmatpush1.bf16.msra.mxu0 0
        %982 = vmatprep.subr.bf16.mxu0 0
        %983 = vmatpush1.bf16.msra.mxu0 0
        %984 = vmatprep.subr.bf16.mxu0 0
        %985 = vmatpush1.bf16.msra.mxu0 0
        %986 = vmatprep.subr.bf16.mxu0 0
        %987 = vmatpush1.bf16.msra.mxu0 0
        %988 = vmatprep.subr.bf16.mxu0 0
        %989 = vmatpush1.bf16.msra.mxu0 0
        %990 = vmatprep.subr.bf16.mxu0 0
        %991 = vmatpush1.bf16.msra.mxu0 0
        %992 = vmatprep.subr.bf16.mxu0 0
        %993 = vmatpush1.bf16.msra.mxu0 0
        %994 = vmatprep.subr.bf16.mxu0 0
        %995 = vmatpush1.bf16.msra.mxu0 0
        %996 = vmatprep.subr.bf16.mxu0 0
        %997 = vmatpush1.bf16.msra.mxu0 0
        %998 = vmatprep.subr.bf16.mxu0 0
        %999 = vmatpush1.bf16.msra.mxu0 0
        %1000 = vmatprep.subr.bf16.mxu0 0
        %1001 = vmatpush1.bf16.msra.mxu0 0
        %1002 = vmatprep.subr.bf16.mxu0 0
        %1003 = vmatpush1.bf16.msra.mxu0 0
        %1004 = vmatprep.subr.bf16.mxu0 0
        %1005 = vmatpush1.bf16.msra.mxu0 0
        %1006 = vmatprep.mubr.bf16.mxu0 0
        %1007 = vmatmul.mubr.bf16.gmra.mrb[0].mxu0 %v664
        %v1008 = vpop.f32.mrb[0].mxu0
        %v1009 = vadd.f32 0.0, %v1008
        %v1010 = vpop.f32.mrb[0].mxu0
        %v1011 = vpop.f32.mrb[0].mxu0
        %v1012 = vpop.f32.mrb[0].mxu0
        %1013 = vdwg.mxu0
        %1014 = vst [vmem:[%s655 + $0x38] sm:$0xff] %v1009
        %s1015 = sand.u32 %s280, 1
        %s1016 = scalar_lea.sflag [#allocation4], %s1015
        %s1017 = sand.u32 %s280, 1
        %s1018 = smul.addr %s1017, 64
        %s1019 = scalar_lea.vmem [#allocation17], %s1018
        // Predicated region
        $region93: #{tpu_custom_call.1} parent=55 // pred_check
          %p1020 = pneg %p290
        $region94: #{tpu_custom_call.1} parent=55 // pred_check_branch
          %1022 = sbr.rel (%p1020) target = $region96
        $region95: #{tpu_custom_call.1} parent=55 // pred_region
          %s1024 = ssub.s32 1024, 1024
          %1025 = vsyncadd %s1016, %s1024
          %s1026 = smul.addr %s38, 8
          %s1027 = smul.addr %s1026, 128
          %s1028 = scalar_lea.hbm %s9, %s1027
          %s1030 = sshll.u32 %s1019, 4
          %s1031 = int_to_ptr.vmem [resolvable:$true] %s1030
          %1033 = dma.vmem_to_hbm [thread:$0]  %s1031, 1024, %s1028, %s1016
        $region96: #{tpu_custom_call.1} parent=55 // pred_fallthru
          _
      $region56: #{tpu_custom_call.1} parent=5 // pred_fallthru
        _
      %p1034 = scmp.le.s32.totalorder 2, %s33
      // Predicated region
      $region97: #{tpu_custom_call.1} parent=5 // pred_check
        %p1035 = pneg %p1034
      $region98: #{tpu_custom_call.1} parent=5 // pred_check_branch
        %1037 = sbr.rel (%p1035) target = $region100
      $region99: #{tpu_custom_call.1} parent=5 // pred_region
        %s1038 = ssub.s32 %s33, 2
        // Predicated region
        $region101: #{tpu_custom_call.1} parent=99 // pred_check
          %p1039 = pneg %p296
        $region102: #{tpu_custom_call.1} parent=99 // pred_check_branch
          %1041 = sbr.rel (%p1039) target = $region104
        $region103: #{tpu_custom_call.1} parent=99 // pred_region
          %s1042 = sand.u32 %s281, 1
          %s1043 = scalar_lea.sflag [#allocation4], %s1042
          %s1044 = sand.u32 %s281, 1
          %s1045 = smul.addr %s1044, 64
          %s1046 = scalar_lea.vmem [#allocation17], %s1045
          %1047 = dma.done %s1043, 1024
        $region104: #{tpu_custom_call.1} parent=99 // pred_fallthru
          _
      $region100: #{tpu_custom_call.1} parent=5 // pred_fallthru
        _
    $region6: #{tpu_custom_call.1} parent=1 // loop_footer
      %s37 = sadd.s32 1, %s33
    $region7: #{tpu_custom_call.1} parent=1 // loop_footer_branch
      %32 = sbr.rel target = $region3
    $region8: #{tpu_custom_call.1} parent=1 // loop_exit
      _
    %1048 = vsyncpa [#allocation3], 1
    %s1049 = scalar_lea.sflag [#allocation3], 1
    %1050 = vsyncpa %s1049, 1
    %1051 = vsyncpa [#allocation6], 1
    %s1052 = scalar_lea.sflag [#allocation6], 1
    %1053 = vsyncpa %s1052, 1
    %1054 = vsyncpa [#allocation9], 1
    %s1055 = scalar_lea.sflag [#allocation9], 1
    %1056 = vsyncpa %s1055, 1
    %1057 = vsyncpa [#allocation12], 1
    %s1058 = scalar_lea.sflag [#allocation12], 1
    %1059 = vsyncpa %s1058, 1
    %1060 = vsyncpa [#allocation15], 1
    %s1061 = scalar_lea.sflag [#allocation15], 1
    %1062 = vsyncpa %s1061, 1
    %1063 = vsyncpa [#allocation4], 1
    %s1064 = scalar_lea.sflag [#allocation4], 1
    %1065 = vsyncpa %s1064, 1

</llo_original>
